<compile_context>
chip_gen: v6e
topology: v6e:2x2x1
jax: 0.10.0
libtpu: 0.0.40
codegen_flags: <defaults>
</compile_context>

<pallas_src>
import functools

import jax
import jax.numpy as jnp
from jax.experimental import pallas as pl
from jax.experimental.pallas import tpu as pltpu

OBS_DIM = 32
HIDDEN = 64          # hidden_sizes = [64, 64]
LN_EPS = 1e-5        # torch.nn.LayerNorm default


# --------------------------------------------------------------- helpers ----

def _round_up(x, m):
    return (x + m - 1) // m * m


def _layernorm_noaffine(h):
    """LayerNorm without the affine (gamma/beta are folded into the next Linear)."""
    mu = jnp.mean(h, axis=-1, keepdims=True)
    var = jnp.mean((h - mu) * (h - mu), axis=-1, keepdims=True)
    return (h - mu) * jax.lax.rsqrt(var + LN_EPS)


def _layernorm_affine(h, g, b):
    return _layernorm_noaffine(h) * g + b


def fold_layernorm_affines(params, matmul_dtype=jnp.float32):
    """Fold each LayerNorm's (gamma, beta) into the Linear layer that follows it.

    (LN_raw(x) * g + b) @ W + c  ==  LN_raw(x) @ (diag(g) W) + (b @ W + c)

    Returned weights are stored [in, out]; wv is stored as a (1, HIDDEN) row so
    the kernel can apply it with a VPU multiply + lane reduce.
    """
    hi = jax.lax.Precision.HIGHEST  # one-time param prep: keep it exact
    w1 = params["fn_g"].reshape(-1, 1) * params["w1"]
    b1 = jnp.dot(params["fn_b"], params["w1"], precision=hi) + params["b1"]
    w2 = params["ln1_g"].reshape(-1, 1) * params["w2"]
    b2 = jnp.dot(params["ln1_b"], params["w2"], precision=hi) + params["b2"]
    wv = params["ln2_g"] * params["wv"].T                       # (1, HIDDEN)
    bv = jnp.dot(params["ln2_b"], params["wv"], precision=hi) + params["bv"]
    return {
        "w1": w1.astype(matmul_dtype), "b1": b1.astype(jnp.float32),
        "w2": w2.astype(matmul_dtype), "b2": b2.astype(jnp.float32),
        "wv": wv.astype(jnp.float32),  "bv": bv.astype(jnp.float32),
    }


# ---------------------------------------------------------------- kernel ----

def _make_kernel(matmul_dtype):
    def vcritic_kernel(x_ref, w1_ref, b1_ref, w2_ref, b2_ref, wv_ref, bv_ref,
                       v_ref):
        # MLPBase.feature_norm (affine folded into W1/b1).
        x = _layernorm_noaffine(x_ref[...].astype(jnp.float32))

        # MLP block 1: Linear -> ReLU -> LayerNorm (affine folded into W2/b2).
        h = jnp.dot(x.astype(matmul_dtype), w1_ref[...],
                    preferred_element_type=jnp.float32) + b1_ref[...]
        h = jnp.maximum(h, 0.0)
        h = _layernorm_noaffine(h)

        # MLP block 2: Linear -> ReLU -> LayerNorm (affine folded into Wv/bv).
        h = jnp.dot(h.astype(matmul_dtype), w2_ref[...],
                    preferred_element_type=jnp.float32) + b2_ref[...]
        h = jnp.maximum(h, 0.0)
        h = _layernorm_noaffine(h)

        # v_out as a VPU multiply + cross-lane (XLU) reduce instead of an N=1
        # MXU matmul; the result is stored lane-dense (batch on the lane axis).
        v = jnp.sum(h * wv_ref[...], axis=-1)          # (bt,)
        v_ref[...] = v[None, :] + bv_ref[...]          # (1, bt)

    return vcritic_kernel


# --------------------------------------------------------------- wrapper ----

def vcritic_forward(cent_obs, rnn_states, masks, params, *,
                    batch_tile=512, matmul_dtype=jnp.float32):
    """Pallas implementation of VCritic.forward.

    Returns (values [B, 1] float32, rnn_states passed through unchanged).
    `masks` is unused because use_recurrent_policy=False (kept for API parity).

    matmul_dtype: jnp.float32 (default, best on v5e) or jnp.bfloat16
                  (recommended for large batches on v6e/v7x); accumulation and
                  LayerNorm math stay in float32 either way.
    """
    del masks
    B, D = cent_obs.shape
    assert D == OBS_DIM

    p = fold_layernorm_affines(params, matmul_dtype)

    x = cent_obs.astype(jnp.float32)

    # Tile choice: whole (sublane-padded) batch in one block when it fits the
    # requested tile (grid collapses to (1,)), otherwise lane-aligned tiles.
    b8 = _round_up(B, 8)                      # f32 sublane granularity
    if b8 <= batch_tile:
        bt = b8
    else:
        assert batch_tile % 128 == 0, "multi-tile grids need lane-aligned tiles"
        bt = batch_tile
    b_pad = _round_up(B, bt)
    if b_pad != B:
        x = jnp.pad(x, ((0, b_pad - B), (0, 0)))
    num_tiles = b_pad // bt

    # Parameters use constant index maps -> DMA'd once, not per grid step.
    full = lambda shape: pl.BlockSpec(shape, lambda i: (0, 0))

    v_row = pl.pallas_call(
        _make_kernel(matmul_dtype),
        out_shape=jax.ShapeDtypeStruct((1, b_pad), jnp.float32),
        grid=(num_tiles,),
        in_specs=[
            pl.BlockSpec((bt, OBS_DIM), lambda i: (i, 0)),   # cent_obs tile
            full((OBS_DIM, HIDDEN)), full((1, HIDDEN)),      # W1', b1'
            full((HIDDEN, HIDDEN)), full((1, HIDDEN)),       # W2', b2'
            full((1, HIDDEN)), full((1, 1)),                 # wv' (row), bv'
        ],
        # Lane-dense output: batch lives on the 128-lane axis.
        out_specs=pl.BlockSpec((1, bt), lambda i: (0, i)),
        compiler_params=pltpu.CompilerParams(
            dimension_semantics=("parallel",)),              # v7x megacore
    )(x, p["w1"], p["b1"], p["w2"], p["b2"], p["wv"], p["bv"])

    values = v_row[0, :B].reshape(B, 1)
    return values, rnn_states


# ------------------------------------------------------------- references ----

def vcritic_reference(cent_obs, rnn_states, masks, params, precision=None):
    """Pure-JAX reference of the original (unfolded) forward."""
    del masks
    mm = functools.partial(jnp.dot, precision=precision)
    x = _layernorm_affine(cent_obs.astype(jnp.float32),
                          params["fn_g"], params["fn_b"])
    h = jnp.maximum(mm(x, params["w1"]) + params["b1"], 0.0)
    h = _layernorm_affine(h, params["ln1_g"], params["ln1_b"])
    h = jnp.maximum(mm(h, params["w2"]) + params["b2"], 0.0)
    h = _layernorm_affine(h, params["ln2_g"], params["ln2_b"])
    v = mm(h, params["wv"]) + params["bv"]
    return v, rnn_states


def vcritic_reference_folded(cent_obs, folded, precision=None):
    """Pure-JAX forward over the folded params, mirroring the kernel math."""
    mm = functools.partial(jnp.dot, precision=precision)
    x = _layernorm_noaffine(cent_obs.astype(jnp.float32))
    h = jnp.maximum(mm(x, folded["w1"]) + folded["b1"], 0.0)
    h = _layernorm_noaffine(h)
    h = jnp.maximum(mm(h, folded["w2"]) + folded["b2"], 0.0)
    h = _layernorm_noaffine(h)
    return jnp.sum(h * folded["wv"], axis=-1, keepdims=True) + folded["bv"]


def make_params(key):
    """Deterministic synthetic parameters (shapes follow the module __init__).

    LayerNorm gammas/betas would be 1/0 right after construction; they are
    perturbed here to emulate trained values so the affine folding is actually
    exercised by the correctness checks.
    """
    ks = jax.random.split(key, 11)
    n = lambda k, shape, s: jax.random.normal(k, shape, jnp.float32) * s
    return {
        "fn_g": 1.0 + n(ks[0], (1, OBS_DIM), 0.05),
        "fn_b": n(ks[1], (1, OBS_DIM), 0.05),
        "w1":   n(ks[2], (OBS_DIM, HIDDEN), 0.1),      # stored [in, out] = W.T
        "b1":   n(ks[3], (1, HIDDEN), 0.01),
        "ln1_g": 1.0 + n(ks[4], (1, HIDDEN), 0.05),
        "ln1_b": n(ks[5], (1, HIDDEN), 0.05),
        "w2":   n(ks[6], (HIDDEN, HIDDEN), 0.1),
        "b2":   n(ks[7], (1, HIDDEN), 0.01),
        "ln2_g": 1.0 + n(ks[8], (1, HIDDEN), 0.05),
        "ln2_b": n(ks[9], (1, HIDDEN), 0.05),
        "wv":   n(ks[10], (HIDDEN, 1), 0.1),
        "bv":   jnp.zeros((1, 1), jnp.float32),        # init_() -> constant 0
    }


# ------------------------------------------------------------------- main ----

if __name__ == "__main__":
    key = jax.random.PRNGKey(0)
    kp, kx, kr, kx2 = jax.random.split(key, 4)

    B = 16            # rollout threads
    RECURRENT_N = 1

    params = make_params(kp)
    folded = fold_layernorm_affines(params)
    hi = jax.lax.Precision.HIGHEST

    cent_obs = jax.random.normal(kx, (B, OBS_DIM), jnp.float32)
    rnn_states = jax.random.normal(kr, (B, RECURRENT_N, HIDDEN), jnp.float32)
    masks = jnp.ones((B, 1), jnp.float32)

    # --- run the kernel (small batch: single block, grid=(1,)) ---
    values, rnn_out = vcritic_forward(cent_obs, rnn_states, masks, params)
    values = jax.block_until_ready(values)
    rnn_out = jax.block_until_ready(rnn_out)
    assert values.shape == (B, 1)
    assert rnn_out.shape == (B, RECURRENT_N, HIDDEN)
    assert bool(jnp.allclose(rnn_out, rnn_states))

    # 1) Strict: kernel vs pure-JAX forward over identical (folded) operands.
    ref_strict = vcritic_reference_folded(cent_obs, folded)
    assert bool(jnp.allclose(values, ref_strict, atol=2e-5, rtol=2e-5))

    # 2) Strict: affine-folding algebra (both refs at HIGHEST precision).
    ref_spec_hi, _ = vcritic_reference(cent_obs, rnn_states, masks, params,
                                       precision=hi)
    ref_fold_hi = vcritic_reference_folded(cent_obs, folded, precision=hi)
    assert bool(jnp.allclose(ref_fold_hi, ref_spec_hi, atol=2e-5, rtol=2e-5))

    # 3) Loose end-to-end spec check (tolerates default-matmul-precision noise
    #    between folded and unfolded operand orderings).
    ref_spec, _ = vcritic_reference(cent_obs, rnn_states, masks, params)
    assert bool(jnp.allclose(values, ref_spec, atol=5e-2, rtol=5e-2))

    # --- second call: ragged batch, multi-tile grid, lane-aligned tiles ---
    B2 = 300
    cent_obs2 = jax.random.normal(kx2, (B2, OBS_DIM), jnp.float32)
    rnn2 = jnp.zeros((B2, RECURRENT_N, HIDDEN), jnp.float32)
    masks2 = jnp.ones((B2, 1), jnp.float32)
    values2, _ = vcritic_forward(cent_obs2, rnn2, masks2, params,
                                 batch_tile=128)
    values2 = jax.block_until_ready(values2)
    assert values2.shape == (B2, 1)
    ref2 = vcritic_reference_folded(cent_obs2, folded)
    assert bool(jnp.allclose(values2, ref2, atol=2e-5, rtol=2e-5))

    print("KERNEL_OK")
</pallas_src>

<mosaic_0001>
module attributes {stable_mosaic.version = 11 : i64} {
  func.func @vcritic_kernel(%arg0: i32, %arg1: memref<16x32xf32, #tpu.memory_space<vmem>>, %arg2: memref<32x64xf32, #tpu.memory_space<vmem>>, %arg3: memref<1x64xf32, #tpu.memory_space<vmem>>, %arg4: memref<64x64xf32, #tpu.memory_space<vmem>>, %arg5: memref<1x64xf32, #tpu.memory_space<vmem>>, %arg6: memref<1x64xf32, #tpu.memory_space<vmem>>, %arg7: memref<1x1xf32, #tpu.memory_space<vmem>>, %arg8: memref<1x16xf32, #tpu.memory_space<vmem>>) attributes {dimension_semantics = [#tpu.dimension_semantics<parallel>], iteration_bounds = array<i64: 1>, scalar_prefetch = 0 : i64, scratch_operands = 0 : i64, tpu.core_type = #tpu.core_type<tc>, window_params = [{transform_indices = @transform_0, window_bounds = array<i64: 16, 32>}, {pipeline_mode = #tpu.pipeline_mode<synchronous>, transform_indices = @transform_1, window_bounds = array<i64: 32, 64>}, {pipeline_mode = #tpu.pipeline_mode<synchronous>, transform_indices = @transform_2, window_bounds = array<i64: 1, 64>}, {pipeline_mode = #tpu.pipeline_mode<synchronous>, transform_indices = @transform_3, window_bounds = array<i64: 64, 64>}, {pipeline_mode = #tpu.pipeline_mode<synchronous>, transform_indices = @transform_4, window_bounds = array<i64: 1, 64>}, {pipeline_mode = #tpu.pipeline_mode<synchronous>, transform_indices = @transform_5, window_bounds = array<i64: 1, 64>}, {pipeline_mode = #tpu.pipeline_mode<synchronous>, transform_indices = @transform_6, window_bounds = array<i64: 1, 1>}, {transform_indices = @transform_7, window_bounds = array<i64: 1, 16>}]} {
    %c0 = arith.constant 0 : index
    %c0_0 = arith.constant 0 : index
    %0 = vector.load %arg1[%c0, %c0_0] : memref<16x32xf32, #tpu.memory_space<vmem>>, vector<16x32xf32>
    %cst = arith.constant dense<0.000000e+00> : vector<16xf32>
    %1 = vector.multi_reduction <add>, %0, %cst [1] : vector<16x32xf32> to vector<16xf32>
    %2 = vector.shape_cast %1 : vector<16xf32> to vector<16x1xf32>
    %cst_1 = arith.constant 3.200000e+01 : f32
    %3 = vector.broadcast %cst_1 : f32 to vector<16x1xf32>
    %4 = arith.divf %2, %3 : vector<16x1xf32>
    %5 = vector.broadcast %4 : vector<16x1xf32> to vector<16x32xf32>
    %6 = arith.subf %0, %5 : vector<16x32xf32>
    %7 = vector.broadcast %4 : vector<16x1xf32> to vector<16x32xf32>
    %8 = arith.subf %0, %7 : vector<16x32xf32>
    %9 = arith.mulf %6, %8 : vector<16x32xf32>
    %cst_2 = arith.constant dense<0.000000e+00> : vector<16xf32>
    %10 = vector.multi_reduction <add>, %9, %cst_2 [1] : vector<16x32xf32> to vector<16xf32>
    %11 = vector.shape_cast %10 : vector<16xf32> to vector<16x1xf32>
    %cst_3 = arith.constant 3.200000e+01 : f32
    %12 = vector.broadcast %cst_3 : f32 to vector<16x1xf32>
    %13 = arith.divf %11, %12 : vector<16x1xf32>
    %14 = vector.broadcast %4 : vector<16x1xf32> to vector<16x32xf32>
    %15 = arith.subf %0, %14 : vector<16x32xf32>
    %cst_4 = arith.constant 9.99999974E-6 : f32
    %16 = vector.broadcast %cst_4 : f32 to vector<16x1xf32>
    %17 = arith.addf %13, %16 : vector<16x1xf32>
    %18 = math.rsqrt %17 : vector<16x1xf32>
    %19 = vector.broadcast %18 : vector<16x1xf32> to vector<16x32xf32>
    %20 = arith.mulf %15, %19 : vector<16x32xf32>
    %c0_5 = arith.constant 0 : index
    %c0_6 = arith.constant 0 : index
    %21 = vector.load %arg2[%c0_5, %c0_6] : memref<32x64xf32, #tpu.memory_space<vmem>>, vector<32x64xf32>
    %cst_7 = arith.constant dense<0.000000e+00> : vector<16x64xf32>
    %22 = tpu.matmul %20, %21, %cst_7 {dimension_numbers = #tpu.dot_dimension_numbers<[1], [0], [0], [1], [0, 0, 1, 1], [], []>} : vector<16x32xf32>, vector<32x64xf32>, vector<16x64xf32> -> vector<16x64xf32>
    %c0_8 = arith.constant 0 : index
    %c0_9 = arith.constant 0 : index
    %23 = vector.load %arg3[%c0_8, %c0_9] : memref<1x64xf32, #tpu.memory_space<vmem>>, vector<1x64xf32>
    %24 = vector.broadcast %23 : vector<1x64xf32> to vector<16x64xf32>
    %25 = arith.addf %22, %24 : vector<16x64xf32>
    %cst_10 = arith.constant 0.000000e+00 : f32
    %26 = vector.broadcast %cst_10 : f32 to vector<16x64xf32>
    %27 = arith.maximumf %25, %26 : vector<16x64xf32>
    %cst_11 = arith.constant dense<0.000000e+00> : vector<16xf32>
    %28 = vector.multi_reduction <add>, %27, %cst_11 [1] : vector<16x64xf32> to vector<16xf32>
    %29 = vector.shape_cast %28 : vector<16xf32> to vector<16x1xf32>
    %cst_12 = arith.constant 6.400000e+01 : f32
    %30 = vector.broadcast %cst_12 : f32 to vector<16x1xf32>
    %31 = arith.divf %29, %30 : vector<16x1xf32>
    %32 = vector.broadcast %31 : vector<16x1xf32> to vector<16x64xf32>
    %33 = arith.subf %27, %32 : vector<16x64xf32>
    %34 = vector.broadcast %31 : vector<16x1xf32> to vector<16x64xf32>
    %35 = arith.subf %27, %34 : vector<16x64xf32>
    %36 = arith.mulf %33, %35 : vector<16x64xf32>
    %cst_13 = arith.constant dense<0.000000e+00> : vector<16xf32>
    %37 = vector.multi_reduction <add>, %36, %cst_13 [1] : vector<16x64xf32> to vector<16xf32>
    %38 = vector.shape_cast %37 : vector<16xf32> to vector<16x1xf32>
    %cst_14 = arith.constant 6.400000e+01 : f32
    %39 = vector.broadcast %cst_14 : f32 to vector<16x1xf32>
    %40 = arith.divf %38, %39 : vector<16x1xf32>
    %41 = vector.broadcast %31 : vector<16x1xf32> to vector<16x64xf32>
    %42 = arith.subf %27, %41 : vector<16x64xf32>
    %cst_15 = arith.constant 9.99999974E-6 : f32
    %43 = vector.broadcast %cst_15 : f32 to vector<16x1xf32>
    %44 = arith.addf %40, %43 : vector<16x1xf32>
    %45 = math.rsqrt %44 : vector<16x1xf32>
    %46 = vector.broadcast %45 : vector<16x1xf32> to vector<16x64xf32>
    %47 = arith.mulf %42, %46 : vector<16x64xf32>
    %c0_16 = arith.constant 0 : index
    %c0_17 = arith.constant 0 : index
    %48 = vector.load %arg4[%c0_16, %c0_17] : memref<64x64xf32, #tpu.memory_space<vmem>>, vector<64x64xf32>
    %cst_18 = arith.constant dense<0.000000e+00> : vector<16x64xf32>
    %49 = tpu.matmul %47, %48, %cst_18 {dimension_numbers = #tpu.dot_dimension_numbers<[1], [0], [0], [1], [0, 0, 1, 1], [], []>} : vector<16x64xf32>, vector<64x64xf32>, vector<16x64xf32> -> vector<16x64xf32>
    %c0_19 = arith.constant 0 : index
    %c0_20 = arith.constant 0 : index
    %50 = vector.load %arg5[%c0_19, %c0_20] : memref<1x64xf32, #tpu.memory_space<vmem>>, vector<1x64xf32>
    %51 = vector.broadcast %50 : vector<1x64xf32> to vector<16x64xf32>
    %52 = arith.addf %49, %51 : vector<16x64xf32>
    %cst_21 = arith.constant 0.000000e+00 : f32
    %53 = vector.broadcast %cst_21 : f32 to vector<16x64xf32>
    %54 = arith.maximumf %52, %53 : vector<16x64xf32>
    %cst_22 = arith.constant dense<0.000000e+00> : vector<16xf32>
    %55 = vector.multi_reduction <add>, %54, %cst_22 [1] : vector<16x64xf32> to vector<16xf32>
    %56 = vector.shape_cast %55 : vector<16xf32> to vector<16x1xf32>
    %cst_23 = arith.constant 6.400000e+01 : f32
    %57 = vector.broadcast %cst_23 : f32 to vector<16x1xf32>
    %58 = arith.divf %56, %57 : vector<16x1xf32>
    %59 = vector.broadcast %58 : vector<16x1xf32> to vector<16x64xf32>
    %60 = arith.subf %54, %59 : vector<16x64xf32>
    %61 = vector.broadcast %58 : vector<16x1xf32> to vector<16x64xf32>
    %62 = arith.subf %54, %61 : vector<16x64xf32>
    %63 = arith.mulf %60, %62 : vector<16x64xf32>
    %cst_24 = arith.constant dense<0.000000e+00> : vector<16xf32>
    %64 = vector.multi_reduction <add>, %63, %cst_24 [1] : vector<16x64xf32> to vector<16xf32>
    %65 = vector.shape_cast %64 : vector<16xf32> to vector<16x1xf32>
    %cst_25 = arith.constant 6.400000e+01 : f32
    %66 = vector.broadcast %cst_25 : f32 to vector<16x1xf32>
    %67 = arith.divf %65, %66 : vector<16x1xf32>
    %68 = vector.broadcast %58 : vector<16x1xf32> to vector<16x64xf32>
    %69 = arith.subf %54, %68 : vector<16x64xf32>
    %cst_26 = arith.constant 9.99999974E-6 : f32
    %70 = vector.broadcast %cst_26 : f32 to vector<16x1xf32>
    %71 = arith.addf %67, %70 : vector<16x1xf32>
    %72 = math.rsqrt %71 : vector<16x1xf32>
    %73 = vector.broadcast %72 : vector<16x1xf32> to vector<16x64xf32>
    %74 = arith.mulf %69, %73 : vector<16x64xf32>
    %c0_27 = arith.constant 0 : index
    %c0_28 = arith.constant 0 : index
    %75 = vector.load %arg6[%c0_27, %c0_28] : memref<1x64xf32, #tpu.memory_space<vmem>>, vector<1x64xf32>
    %76 = vector.broadcast %75 : vector<1x64xf32> to vector<16x64xf32>
    %77 = arith.mulf %74, %76 : vector<16x64xf32>
    %cst_29 = arith.constant dense<0.000000e+00> : vector<16xf32>
    %78 = vector.multi_reduction <add>, %77, %cst_29 [1] : vector<16x64xf32> to vector<16xf32>
    %79 = vector.shape_cast %78 : vector<16xf32> to vector<1x16xf32>
    %c0_30 = arith.constant 0 : index
    %c0_31 = arith.constant 0 : index
    %80 = vector.load %arg7[%c0_30, %c0_31] : memref<1x1xf32, #tpu.memory_space<vmem>>, vector<1x1xf32>
    %81 = vector.broadcast %80 : vector<1x1xf32> to vector<1x16xf32>
    %82 = arith.addf %79, %81 : vector<1x16xf32>
    %c0_32 = arith.constant 0 : index
    %c0_33 = arith.constant 0 : index
    %83 = vector.load %arg8[%c0_32, %c0_33] : memref<1x16xf32, #tpu.memory_space<vmem>>, vector<1x16xf32>
    tpu.vector_store %arg8[%c0_32, %c0_33], %82 {strides = array<i32>} : memref<1x16xf32, #tpu.memory_space<vmem>>, vector<1x16xf32>,
    return
  }
  func.func @transform_0(%arg0: i32) -> (i32, i32) {
    %c0_i32 = arith.constant 0 : i32
    %c0_i32_0 = arith.constant 0 : i32
    return %arg0, %c0_i32 : i32, i32
  }
  func.func @transform_1(%arg0: i32) -> (i32, i32) {
    %c0_i32 = arith.constant 0 : i32
    %c0_i32_0 = arith.constant 0 : i32
    %c0_i32_1 = arith.constant 0 : i32
    return %c0_i32, %c0_i32_0 : i32, i32
  }
  func.func @transform_2(%arg0: i32) -> (i32, i32) {
    %c0_i32 = arith.constant 0 : i32
    %c0_i32_0 = arith.constant 0 : i32
    %c0_i32_1 = arith.constant 0 : i32
    return %c0_i32, %c0_i32_0 : i32, i32
  }
  func.func @transform_3(%arg0: i32) -> (i32, i32) {
    %c0_i32 = arith.constant 0 : i32
    %c0_i32_0 = arith.constant 0 : i32
    %c0_i32_1 = arith.constant 0 : i32
    return %c0_i32, %c0_i32_0 : i32, i32
  }
  func.func @transform_4(%arg0: i32) -> (i32, i32) {
    %c0_i32 = arith.constant 0 : i32
    %c0_i32_0 = arith.constant 0 : i32
    %c0_i32_1 = arith.constant 0 : i32
    return %c0_i32, %c0_i32_0 : i32, i32
  }
  func.func @transform_5(%arg0: i32) -> (i32, i32) {
    %c0_i32 = arith.constant 0 : i32
    %c0_i32_0 = arith.constant 0 : i32
    %c0_i32_1 = arith.constant 0 : i32
    return %c0_i32, %c0_i32_0 : i32, i32
  }
  func.func @transform_6(%arg0: i32) -> (i32, i32) {
    %c0_i32 = arith.constant 0 : i32
    %c0_i32_0 = arith.constant 0 : i32
    %c0_i32_1 = arith.constant 0 : i32
    return %c0_i32, %c0_i32_0 : i32, i32
  }
  func.func @transform_7(%arg0: i32) -> (i32, i32) {
    %c0_i32 = arith.constant 0 : i32
    %c0_i32_0 = arith.constant 0 : i32
    return %c0_i32, %arg0 : i32, i32
  }
}

</mosaic_0001>

<llo_original>
// kernel: tpu_custom_call.1
$region0: #{tpu_custom_call.1}
  #allocation0 [shape = 'u32[]', space=smem, size = 0x4, offset = 0x4, fixed_abs, tag = 'smem constant byte address 0x4 - core index']
  #allocation1 [shape = 'u32[144,128]{1,0:T(1,128)}', space=vmem, size = 0x12000, scoped, tag = 'internal scratch']
  #allocation2 [shape = 'f32[1,1]{1,0:T(1,128)S(1)}', space=vmem, size = 0x200, scoped, tag = 'scoped memory for tpu_custom_call.1']
  %s0 = inlined_call_operand.hbm [shape: f32[16,32], index: 0, kind: input, shape index: {}]
  %s1 = inlined_call_operand.hbm [shape: f32[32,64], index: 1, kind: input, shape index: {}]
  %s2 = inlined_call_operand.vmem [shape: f32[1,64], index: 2, kind: input, shape index: {}]
  %s3 = inlined_call_operand.hbm [shape: f32[64,64], index: 3, kind: input, shape index: {}]
  %s4 = inlined_call_operand.vmem [shape: f32[1,64], index: 4, kind: input, shape index: {}]
  %s5 = inlined_call_operand.vmem [shape: f32[1,64], index: 5, kind: input, shape index: {}]
  %s6 = inlined_call_operand.<no memory space> [shape: f32[1,1], index: 6, kind: input, shape index: {}]
  %s7 = inlined_call_operand.hbm [shape: f32[1,16], index: 7, kind: output, shape index: {}]
  %s8 = sld [smem:[#allocation0]]
  $region50: #{tpu_custom_call.1} parent=0
    _
  %s10 = ssub.s32 1, %s8
  %s11 = scalar_select 0, %s10, %s8
  %v12 = vstv %s6
  %13 = vst [vmem:[#allocation2] sm:$0x1] %v12
  $region1: #{tpu_custom_call.1} parent=0
    #allocation3 [shape = 'u8[8192]{0}', space=vmem, size = 0x2000, scoped, tag = 'input window, operand 0, single buffered']
    #allocation4 [shape = 's32[1]{0}', space=sflag, size = 0x4, scoped, tag = 'scoped memory for tpu_custom_call.1']
    #allocation5 [shape = 's32[1]{0}', space=sflag, size = 0x4, scoped, tag = 'scoped memory for tpu_custom_call.1']
    #allocation6 [shape = 'u8[16384]{0}', space=vmem, size = 0x4000, scoped, tag = 'input window, operand 1, single buffered']
    #allocation7 [shape = 's32[1]{0}', space=sflag, size = 0x4, scoped, tag = 'scoped memory for tpu_custom_call.1']
    #allocation8 [shape = 'u8[32768]{0}', space=vmem, size = 0x8000, scoped, tag = 'input window, operand 3, single buffered']
    #allocation9 [shape = 'u8[512]{0}', space=vmem, size = 0x400, scoped, tag = 'output window, operand 0, single buffered']
    %14 = vsyncpa [#allocation4], 0
    %15 = vsyncpa [#allocation7], 0
    %16 = vsyncpa [#allocation5], 0
    // Predicated region
    $region2: #{tpu_custom_call.1} parent=1 // pred_check
      _
    $region3: #{tpu_custom_call.1} parent=1 // pred_check_branch
      %18 = sbr.rel (0) target = $region5
    $region4: #{tpu_custom_call.1} parent=1 // pred_region
      %s20 = ssub.s32 256, 256
      %21 = vsyncadd [#allocation4], %s20
      %s22 = sshll.u32 [#allocation3], 4
      %s23 = int_to_ptr.vmem [resolvable:$true] %s22
      %28 = dma.hbm_to_vmem [thread:$0]  %s0, 256, %s23, [#allocation4], 128, 128, 8
    $region5: #{tpu_custom_call.1} parent=1 // pred_fallthru
      _
    // Predicated region
    $region6: #{tpu_custom_call.1} parent=1 // pred_check
      _
    $region7: #{tpu_custom_call.1} parent=1 // pred_check_branch
      %30 = sbr.rel (0) target = $region9
    $region8: #{tpu_custom_call.1} parent=1 // pred_region
      %s32 = ssub.s32 512, 512
      %33 = vsyncadd [#allocation7], %s32
      %s34 = sshll.u32 [#allocation6], 4
      %s35 = int_to_ptr.vmem [resolvable:$true] %s34
      %40 = dma.hbm_to_vmem [thread:$0]  %s1, 512, %s35, [#allocation7], 128, 128, 8
    $region9: #{tpu_custom_call.1} parent=1 // pred_fallthru
      _
    // Predicated region
    $region10: #{tpu_custom_call.1} parent=1 // pred_check
      _
    $region11: #{tpu_custom_call.1} parent=1 // pred_check_branch
      %42 = sbr.rel (0) target = $region13
    $region12: #{tpu_custom_call.1} parent=1 // pred_region
      _
    $region13: #{tpu_custom_call.1} parent=1 // pred_fallthru
      _
    // Predicated region
    $region14: #{tpu_custom_call.1} parent=1 // pred_check
      _
    $region15: #{tpu_custom_call.1} parent=1 // pred_check_branch
      %44 = sbr.rel (0) target = $region17
    $region16: #{tpu_custom_call.1} parent=1 // pred_region
      %s46 = ssub.s32 1024, 1024
      %47 = vsyncadd [#allocation7], %s46
      %s48 = sshll.u32 [#allocation8], 4
      %s49 = int_to_ptr.vmem [resolvable:$true] %s48
      %54 = dma.hbm_to_vmem [thread:$0]  %s3, 1024, %s49, [#allocation7], 128, 128, 8
    $region17: #{tpu_custom_call.1} parent=1 // pred_fallthru
      _
    // Predicated region
    $region18: #{tpu_custom_call.1} parent=1 // pred_check
      _
    $region19: #{tpu_custom_call.1} parent=1 // pred_check_branch
      %56 = sbr.rel (0) target = $region21
    $region20: #{tpu_custom_call.1} parent=1 // pred_region
      _
    $region21: #{tpu_custom_call.1} parent=1 // pred_fallthru
      _
    // Predicated region
    $region22: #{tpu_custom_call.1} parent=1 // pred_check
      _
    $region23: #{tpu_custom_call.1} parent=1 // pred_check_branch
      %58 = sbr.rel (0) target = $region25
    $region24: #{tpu_custom_call.1} parent=1 // pred_region
      _
    $region25: #{tpu_custom_call.1} parent=1 // pred_fallthru
      _
    // Predicated region
    $region26: #{tpu_custom_call.1} parent=1 // pred_check
      _
    $region27: #{tpu_custom_call.1} parent=1 // pred_check_branch
      %60 = sbr.rel (0) target = $region29
    $region28: #{tpu_custom_call.1} parent=1 // pred_region
      _
    $region29: #{tpu_custom_call.1} parent=1 // pred_fallthru
      _
    // Predicated region
    $region30: #{tpu_custom_call.1} parent=1 // pred_check
      _
    $region31: #{tpu_custom_call.1} parent=1 // pred_check_branch
      %62 = sbr.rel (0) target = $region33
    $region32: #{tpu_custom_call.1} parent=1 // pred_region
      %63 = dma.done [#allocation4], 256
    $region33: #{tpu_custom_call.1} parent=1 // pred_fallthru
      _
    // Predicated region
    $region34: #{tpu_custom_call.1} parent=1 // pred_check
      _
    $region35: #{tpu_custom_call.1} parent=1 // pred_check_branch
      %65 = sbr.rel (0) target = $region37
    $region36: #{tpu_custom_call.1} parent=1 // pred_region
      %66 = dma.done [#allocation7], 512
    $region37: #{tpu_custom_call.1} parent=1 // pred_fallthru
      _
    // Predicated region
    $region38: #{tpu_custom_call.1} parent=1 // pred_check
      _
    $region39: #{tpu_custom_call.1} parent=1 // pred_check_branch
      %68 = sbr.rel (0) target = $region41
    $region40: #{tpu_custom_call.1} parent=1 // pred_region
      %69 = dma.done [#allocation7], 1024
    $region41: #{tpu_custom_call.1} parent=1 // pred_fallthru
      _
    %v70 = vld [vmem:[#allocation3] sm:$0xff]
    %v71 = vld [vmem:[#allocation3 + $0x8] sm:$0xff]
    %vm72 = vcmask 261120
    %v73 = vsel %vm72, %v70, 0.0
    %74 = vadd.xlane.f32.xlu0 %v73
    %v75 = vpop.xlane.xlu0 %74
    %v76 = vsel %vm72, %v71, 0.0
    %77 = vadd.xlane.f32.xlu0 %v76
    %v78 = vpop.xlane.xlu0 %77
    %v79 = vrcp.pop 32.0
    %v80 = vmul.f32 %v75, %v79
    %v81 = vmul.f32 %v78, %v79
    %v82 = vsub.f32 %v70, %v80
    %v83 = vsub.f32 %v71, %v81
    %v84 = vmul.f32 %v82, %v82
    %v85 = vmul.f32 %v83, %v83
    %v86 = vsel %vm72, %v84, 0.0
    %87 = vadd.xlane.f32.xlu0 %v86
    %v88 = vpop.xlane.xlu0 %87
    %v89 = vsel %vm72, %v85, 0.0
    %90 = vadd.xlane.f32.xlu0 %v89
    %v91 = vpop.xlane.xlu0 %90
    %v92 = vmul.f32 %v88, %v79
    %v93 = vmul.f32 %v91, %v79
    %v94 = vadd.f32 %v92, 1e-05
    %v95 = vadd.f32 %v93, 1e-05
    %v96 = vrsqrt.pop %v94
    %v97 = vrsqrt.pop %v95
    %v98 = vmul.f32 %v82, %v96
    %v99 = vmul.f32 %v83, %v97
    %v100 = vld [vmem:[#allocation6] sm:$0xff]
    %v101 = vld [vmem:[#allocation6 + $0x8] sm:$0xff]
    %v102 = vld [vmem:[#allocation6 + $0x10] sm:$0xff]
    %v103 = vld [vmem:[#allocation6 + $0x18] sm:$0xff]
    %v104 = vld [vmem:[%s2] sm:$0x1]
    %v106 = vlaneseq
    %v107 = vshrl.u32 %v106, 7
    %v108 = vsub.s32 0, %v107
    %v109 = vrot.slane %v104, %v108
    %v112 = vsel %vm72, %v98, 0
    %v115 = vsel %vm72, %v99, 0
    %117 = vmatprep.subr.mxu0 0.0
    %118 = vmatpush1.msra.mxu0 0.0
    %119 = vmatprep.subr.mxu0 0.0
    %120 = vmatpush1.msra.mxu0 0.0
    %121 = vmatprep.subr.mxu0 0.0
    %122 = vmatpush1.msra.mxu0 0.0
    %123 = vmatprep.subr.mxu0 0.0
    %124 = vmatpush1.msra.mxu0 0.0
    %125 = vmatprep.subr.mxu0 0.0
    %126 = vmatpush1.msra.mxu0 0.0
    %127 = vmatprep.subr.mxu0 0.0
    %128 = vmatpush1.msra.mxu0 0.0
    %129 = vmatprep.subr.mxu0 0.0
    %130 = vmatpush1.msra.mxu0 0.0
    %131 = vmatprep.subr.mxu0 0.0
    %132 = vmatpush1.msra.mxu0 0.0
    %133 = vmatprep.subr.mxu0 0.0
    %134 = vmatpush1.msra.mxu0 0.0
    %135 = vmatprep.subr.mxu0 0.0
    %136 = vmatpush1.msra.mxu0 0.0
    %137 = vmatprep.subr.mxu0 0.0
    %138 = vmatpush1.msra.mxu0 0.0
    %139 = vmatprep.subr.mxu0 0.0
    %140 = vmatpush1.msra.mxu0 0.0
    %141 = vmatprep.subr.mxu0 0.0
    %142 = vmatpush1.msra.mxu0 %v103
    %143 = vmatprep.subr.mxu0 0.0
    %144 = vmatpush1.msra.mxu0 %v102
    %145 = vmatprep.subr.mxu0 0.0
    %146 = vmatpush1.msra.mxu0 %v101
    %147 = vmatprep.subr.mxu0 0.0
    %148 = vmatpush1.msra.mxu0 %v100
    %149 = vmatprep.subr.mxu0 0.0
    %150 = vmatpush2.msra.mxu0 0.0
    %151 = vmatprep.subr.mxu0 0.0
    %152 = vmatpush2.msra.mxu0 0.0
    %153 = vmatprep.subr.mxu0 0.0
    %154 = vmatpush2.msra.mxu0 0.0
    %155 = vmatprep.subr.mxu0 0.0
    %156 = vmatpush2.msra.mxu0 0.0
    %157 = vmatprep.subr.mxu0 0.0
    %158 = vmatpush2.msra.mxu0 0.0
    %159 = vmatprep.subr.mxu0 0.0
    %160 = vmatpush2.msra.mxu0 0.0
    %161 = vmatprep.subr.mxu0 0.0
    %162 = vmatpush2.msra.mxu0 0.0
    %163 = vmatprep.subr.mxu0 0.0
    %164 = vmatpush2.msra.mxu0 0.0
    %165 = vmatprep.subr.mxu0 0.0
    %166 = vmatpush2.msra.mxu0 0.0
    %167 = vmatprep.subr.mxu0 0.0
    %168 = vmatpush2.msra.mxu0 0.0
    %169 = vmatprep.subr.mxu0 0.0
    %170 = vmatpush2.msra.mxu0 0.0
    %171 = vmatprep.subr.mxu0 0.0
    %172 = vmatpush2.msra.mxu0 0.0
    %173 = vmatprep.subr.mxu0 0.0
    %174 = vmatpush2.msra.mxu0 0.0
    %175 = vmatprep.subr.mxu0 0.0
    %176 = vmatpush2.msra.mxu0 0.0
    %177 = vmatprep.subr.mxu0 0.0
    %178 = vmatpush2.msra.mxu0 0.0
    %179 = vmatprep.subr.mxu0 0.0
    %180 = vmatpush2.msra.mxu0 0.0
    %181 = vmatprep.mubr.f32.mxu0 0.0
    %182 = vmatmul.mubr.f32.gmra.mxu0 %v112
    %v183 = vpop.f32.mrf.mxu0
    %v184 = vadd.f32 %v109, %v183
    %v185 = vpop.f32.mrf.mxu0
    %186 = vmatprep.mubr.f32.mxu0 0.0
    %187 = vmatmul.mubr.f32.gmra.mxu0 %v115
    %v188 = vpop.f32.mrf.mxu0
    %v189 = vadd.f32 %v109, %v188
    %v190 = vpop.f32.mrf.mxu0
    %191 = vdwg.mxu0
    %v192 = vmax.f32 %v184, 0.0
    %v193 = vmax.f32 %v189, 0.0
    %vm194 = vcmask 523264
    %v195 = vsel %vm194, %v192, 0.0
    %196 = vadd.xlane.f32.xlu0 %v195
    %v197 = vpop.xlane.xlu0 %196
    %v198 = vsel %vm194, %v193, 0.0
    %199 = vadd.xlane.f32.xlu0 %v198
    %v200 = vpop.xlane.xlu0 %199
    %v201 = vrcp.pop 64.0
    %v202 = vmul.f32 %v197, %v201
    %v203 = vmul.f32 %v200, %v201
    %v204 = vsub.f32 %v192, %v202
    %v205 = vsub.f32 %v193, %v203
    %v206 = vmul.f32 %v204, %v204
    %v207 = vmul.f32 %v205, %v205
    %v208 = vsel %vm194, %v206, 0.0
    %209 = vadd.xlane.f32.xlu0 %v208
    %v210 = vpop.xlane.xlu0 %209
    %v211 = vsel %vm194, %v207, 0.0
    %212 = vadd.xlane.f32.xlu0 %v211
    %v213 = vpop.xlane.xlu0 %212
    %v214 = vmul.f32 %v210, %v201
    %v215 = vmul.f32 %v213, %v201
    %v216 = vadd.f32 %v214, 1e-05
    %v217 = vadd.f32 %v215, 1e-05
    %v218 = vrsqrt.pop %v216
    %v219 = vrsqrt.pop %v217
    %v220 = vmul.f32 %v204, %v218
    %v221 = vmul.f32 %v205, %v219
    %v222 = vld [vmem:[#allocation8] sm:$0xff]
    %v223 = vld [vmem:[#allocation8 + $0x8] sm:$0xff]
    %v224 = vld [vmem:[#allocation8 + $0x10] sm:$0xff]
    %v225 = vld [vmem:[#allocation8 + $0x18] sm:$0xff]
    %v226 = vld [vmem:[#allocation8 + $0x20] sm:$0xff]
    %v227 = vld [vmem:[#allocation8 + $0x28] sm:$0xff]
    %v228 = vld [vmem:[#allocation8 + $0x30] sm:$0xff]
    %v229 = vld [vmem:[#allocation8 + $0x38] sm:$0xff]
    %v230 = vld [vmem:[%s4] sm:$0x1]
    %v232 = vlaneseq
    %v233 = vshrl.u32 %v232, 7
    %v234 = vsub.s32 0, %v233
    %v235 = vrot.slane %v230, %v234
    %v238 = vsel %vm194, %v220, 0
    %v241 = vsel %vm194, %v221, 0
    %243 = vmatprep.subr.mxu0 0.0
    %244 = vmatpush1.msra.mxu0 0.0
    %245 = vmatprep.subr.mxu0 0.0
    %246 = vmatpush1.msra.mxu0 0.0
    %247 = vmatprep.subr.mxu0 0.0
    %248 = vmatpush1.msra.mxu0 0.0
    %249 = vmatprep.subr.mxu0 0.0
    %250 = vmatpush1.msra.mxu0 0.0
    %251 = vmatprep.subr.mxu0 0.0
    %252 = vmatpush1.msra.mxu0 0.0
    %253 = vmatprep.subr.mxu0 0.0
    %254 = vmatpush1.msra.mxu0 0.0
    %255 = vmatprep.subr.mxu0 0.0
    %256 = vmatpush1.msra.mxu0 0.0
    %257 = vmatprep.subr.mxu0 0.0
    %258 = vmatpush1.msra.mxu0 0.0
    %259 = vmatprep.subr.mxu0 0.0
    %260 = vmatpush1.msra.mxu0 %v229
    %261 = vmatprep.subr.mxu0 0.0
    %262 = vmatpush1.msra.mxu0 %v228
    %263 = vmatprep.subr.mxu0 0.0
    %264 = vmatpush1.msra.mxu0 %v227
    %265 = vmatprep.subr.mxu0 0.0
    %266 = vmatpush1.msra.mxu0 %v226
    %267 = vmatprep.subr.mxu0 0.0
    %268 = vmatpush1.msra.mxu0 %v225
    %269 = vmatprep.subr.mxu0 0.0
    %270 = vmatpush1.msra.mxu0 %v224
    %271 = vmatprep.subr.mxu0 0.0
    %272 = vmatpush1.msra.mxu0 %v223
    %273 = vmatprep.subr.mxu0 0.0
    %274 = vmatpush1.msra.mxu0 %v222
    %275 = vmatprep.subr.mxu0 0.0
    %276 = vmatpush2.msra.mxu0 0.0
    %277 = vmatprep.subr.mxu0 0.0
    %278 = vmatpush2.msra.mxu0 0.0
    %279 = vmatprep.subr.mxu0 0.0
    %280 = vmatpush2.msra.mxu0 0.0
    %281 = vmatprep.subr.mxu0 0.0
    %282 = vmatpush2.msra.mxu0 0.0
    %283 = vmatprep.subr.mxu0 0.0
    %284 = vmatpush2.msra.mxu0 0.0
    %285 = vmatprep.subr.mxu0 0.0
    %286 = vmatpush2.msra.mxu0 0.0
    %287 = vmatprep.subr.mxu0 0.0
    %288 = vmatpush2.msra.mxu0 0.0
    %289 = vmatprep.subr.mxu0 0.0
    %290 = vmatpush2.msra.mxu0 0.0
    %291 = vmatprep.subr.mxu0 0.0
    %292 = vmatpush2.msra.mxu0 0.0
    %293 = vmatprep.subr.mxu0 0.0
    %294 = vmatpush2.msra.mxu0 0.0
    %295 = vmatprep.subr.mxu0 0.0
    %296 = vmatpush2.msra.mxu0 0.0
    %297 = vmatprep.subr.mxu0 0.0
    %298 = vmatpush2.msra.mxu0 0.0
    %299 = vmatprep.subr.mxu0 0.0
    %300 = vmatpush2.msra.mxu0 0.0
    %301 = vmatprep.subr.mxu0 0.0
    %302 = vmatpush2.msra.mxu0 0.0
    %303 = vmatprep.subr.mxu0 0.0
    %304 = vmatpush2.msra.mxu0 0.0
    %305 = vmatprep.subr.mxu0 0.0
    %306 = vmatpush2.msra.mxu0 0.0
    %307 = vmatprep.mubr.f32.mxu0 0.0
    %308 = vmatmul.mubr.f32.gmra.mxu0 %v238
    %v309 = vpop.f32.mrf.mxu0
    %v310 = vadd.f32 %v235, %v309
    %v311 = vpop.f32.mrf.mxu0
    %312 = vmatprep.mubr.f32.mxu0 0.0
    %313 = vmatmul.mubr.f32.gmra.mxu0 %v241
    %v314 = vpop.f32.mrf.mxu0
    %v315 = vadd.f32 %v235, %v314
    %v316 = vpop.f32.mrf.mxu0
    %317 = vdwg.mxu0
    %v318 = vmax.f32 %v310, 0.0
    %v319 = vmax.f32 %v315, 0.0
    %v320 = vsel %vm194, %v318, 0.0
    %321 = vadd.xlane.f32.xlu0 %v320
    %v322 = vpop.xlane.xlu0 %321
    %v323 = vsel %vm194, %v319, 0.0
    %324 = vadd.xlane.f32.xlu0 %v323
    %v325 = vpop.xlane.xlu0 %324
    %v326 = vmul.f32 %v322, %v201
    %v327 = vmul.f32 %v325, %v201
    %v328 = vsub.f32 %v318, %v326
    %v329 = vsub.f32 %v319, %v327
    %v330 = vmul.f32 %v328, %v328
    %v331 = vmul.f32 %v329, %v329
    %v332 = vsel %vm194, %v330, 0.0
    %333 = vadd.xlane.f32.xlu0 %v332
    %v334 = vpop.xlane.xlu0 %333
    %v335 = vsel %vm194, %v331, 0.0
    %336 = vadd.xlane.f32.xlu0 %v335
    %v337 = vpop.xlane.xlu0 %336
    %v338 = vmul.f32 %v334, %v201
    %v339 = vmul.f32 %v337, %v201
    %v340 = vadd.f32 %v338, 1e-05
    %v341 = vadd.f32 %v339, 1e-05
    %v342 = vrsqrt.pop %v340
    %v343 = vrsqrt.pop %v341
    %v344 = vmul.f32 %v328, %v342
    %v345 = vmul.f32 %v329, %v343
    %v346 = vld [vmem:[%s5] sm:$0x1]
    %v348 = vlaneseq
    %v349 = vshrl.u32 %v348, 7
    %v350 = vsub.s32 0, %v349
    %v351 = vrot.slane %v346, %v350
    %v353 = vmul.f32 %v344, %v351
    %v354 = vmul.f32 %v345, %v351
    %v355 = vsel %vm194, %v353, 0.0
    %356 = vadd.xlane.f32.xlu0 %v355
    %v357 = vpop.xlane.xlu0 %356
    %v358 = vsel %vm194, %v354, 0.0
    %359 = vadd.xlane.f32.xlu0 %v358
    %v360 = vpop.xlane.xlu0 %359
    %v361 = vld [vmem:[#allocation2] sm:$0x1]
    %363 = vset.pattern.permute.xlu0 0
    %364 = vperm.xlu0 %363, %v361
    %v365 = vpop.permute.xlu0 %364
    %v367 = vlaneseq
    %v368 = vshrl.u32 %v367, 7
    %v369 = vsub.s32 0, %v368
    %v370 = vrot.slane %v365, %v369
    %v371 = vadd.f32 %v357, %v370
    %v372 = vadd.f32 %v360, %v370
    %v375 = vlaneseq
    %v376 = vand.u32 %v375, 127
    %v377 = vlaneseq
    %v378 = vshrl.u32 %v377, 7
    %v379 = vsub.s32 %v376, %v378
    %v380 = vrot.slane %v371, %v379
    %v381 = vadd.s32 %v376, 4294967288
    %v382 = vlaneseq
    %v383 = vshrl.u32 %v382, 7
    %v384 = vsub.s32 %v381, %v383
    %v385 = vrot.slane %v372, %v384
    %vm386 = vcmask 130112
    %v387 = vsel %vm386, %v385, %v380
    %vm389 = vcmask 122880
    %390 = vst.msk [vmem:[#allocation9] sm:$0x1] %vm389, %v387
    // Predicated region
    $region42: #{tpu_custom_call.1} parent=1 // pred_check
      _
    $region43: #{tpu_custom_call.1} parent=1 // pred_check_branch
      %392 = sbr.rel (0) target = $region45
    $region44: #{tpu_custom_call.1} parent=1 // pred_region
      %s394 = ssub.s32 16, 16
      %395 = vsyncadd [#allocation5], %s394
      %s397 = sshll.u32 [#allocation9], 4
      %s398 = int_to_ptr.vmem [resolvable:$true] %s397
      %400 = dma.vmem_to_hbm [thread:$0]  %s398, 16, %s7, [#allocation5]
    $region45: #{tpu_custom_call.1} parent=1 // pred_fallthru
      _
    // Predicated region
    $region46: #{tpu_custom_call.1} parent=1 // pred_check
      _
    $region47: #{tpu_custom_call.1} parent=1 // pred_check_branch
      %402 = sbr.rel (0) target = $region49
    $region48: #{tpu_custom_call.1} parent=1 // pred_region
      %403 = dma.done [#allocation5], 16
    $region49: #{tpu_custom_call.1} parent=1 // pred_fallthru
      _
    %404 = vsyncpa [#allocation4], 1
    %405 = vsyncpa [#allocation7], 1
    %406 = vsyncpa [#allocation5], 1

</llo_original>
